<compile_context>
chip_gen: v5e
topology: v5e:2x2
jax: 0.10.0
libtpu: 0.0.40
codegen_flags: <defaults>
</compile_context>

<pallas_src>
import functools

import jax
import jax.numpy as jnp
import numpy as np
from jax import lax
from jax.experimental import pallas as pl
from jax.experimental.pallas import tpu as pltpu


# --------------------------------------------------------------------------- #
# Kernel
# --------------------------------------------------------------------------- #
def _kd_clip_kernel(scale_ref, x_ref, a_ref, logits_ref, lse_ref, m_sc, l_sc):
    """grid = (cand shard [parallel], row tile [parallel], cand tile [arbitrary])."""
    j = pl.program_id(2)

    @pl.when(j == 0)
    def _():
        m_sc[...] = jnp.full_like(m_sc, -jnp.inf)
        l_sc[...] = jnp.zeros_like(l_sc)

    scale = scale_ref[0]

    # (tile_m, D) @ (D, tile_n) -> (tile_m, tile_n); bf16 in, f32 accumulate.
    s = scale * jnp.dot(x_ref[...], a_ref[...],
                        preferred_element_type=jnp.float32)
    logits_ref[...] = s.astype(logits_ref.dtype)

    # Online logsumexp over the candidate axis.
    m_new = jnp.maximum(m_sc[...], s.max(axis=-1, keepdims=True))
    l_sc[...] = (l_sc[...] * jnp.exp(m_sc[...] - m_new)
                 + jnp.exp(s - m_new).sum(axis=-1, keepdims=True))
    m_sc[...] = m_new

    @pl.when(j == pl.num_programs(2) - 1)
    def _():
        lse_ref[...] = (m_sc[...] + jnp.log(l_sc[...])).reshape(lse_ref.shape)


# --------------------------------------------------------------------------- #
# Tiling / budgeting helpers
# --------------------------------------------------------------------------- #
def _vmem_budgets():
    """Generation-aware VMEM budgets (soft tile budget, scoped-VMEM request)."""
    phys = 64 * 1024 * 1024  # conservative fallback = v7x per-TC VMEM
    try:
        cap = getattr(pltpu.get_tpu_info(), "vmem_capacity_bytes", None)
        if cap:
            phys = int(cap)
    except Exception:
        pass
    soft = int(phys * 0.55)    # tiles must fit well inside the scoped limit
    limit = int(phys * 0.70)   # explicit scoped-VMEM request, leaves headroom
    return soft, limit


def _default_num_shards():
    """v7x has 2 TensorCores/chip: shard the candidate axis across them."""
    try:
        kind = jax.devices()[0].device_kind.lower()
    except Exception:
        return 1
    return 2 if ("v7" in kind or "7x" in kind) else 1


def _vmem_tile_bytes(tile_m, tile_n, embed, logit_bytes):
    cand = 2 * embed * tile_n * 2          # double-buffered bf16 (D, tile_n) tiles
    logits = 2 * tile_m * tile_n * logit_bytes
    x = 2 * tile_m * embed * 2             # X tile (conservatively double-buffered)
    lse_out = 2 * tile_m * 128 * 4         # lane-padded partial-lse block
    scratch = 2 * tile_m * 128 * 4         # m_sc + l_sc, lane-padded to 128
    return cand + logits + x + lse_out + scratch


def _pick_tiles(rows, embed, per_shard, tile_n_req, budget, logit_bytes):
    """Pick (tile_m, tile_n): largest candidate tile that fits the VMEM budget,
    shrinking the row tile only when the full row block cannot fit."""
    tm_candidates = [rows] + sorted(
        {m for m in range(8, rows, 8) if rows % m == 0}, reverse=True)
    cap = min(tile_n_req, per_shard)
    for tm in tm_candidates:
        best_tn = None
        tn = 128
        while tn <= cap:
            if per_shard % tn == 0 and _vmem_tile_bytes(tm, tn, embed, logit_bytes) <= budget:
                best_tn = tn
            tn += 128
        if best_tn is not None:
            return tm, best_tn
    # Fallback: smallest legal tiles (only reachable for pathological shapes).
    tm = 8 if (rows >= 8 and rows % 8 == 0) else rows
    return tm, 128


# --------------------------------------------------------------------------- #
# Public wrapper
# --------------------------------------------------------------------------- #
def kd_clip_momentum_memory_bank_loss(input_image, input_text, target,
                                      memory_bank, logit_scale, *,
                                      tile_n=2048, num_shards=None,
                                      logits_dtype=jnp.float32):
    """Pallas implementation of KDClipMomentumMemoryBankLoss.compute_loss."""
    B, D = input_image.shape
    all_target = jnp.concatenate([target, memory_bank], axis=0)   # (N, D)
    N = all_target.shape[0]
    rows = 2 * B

    assert N % 128 == 0, "candidate axis (B + memory bank size) must tile by 128"
    if num_shards is None:
        num_shards = _default_num_shards()
    if num_shards < 1 or N % (num_shards * 128) != 0:
        num_shards = 1
    per_shard = N // num_shards

    soft_budget, vmem_limit = _vmem_budgets()
    logit_bytes = jnp.dtype(logits_dtype).itemsize
    tile_m, tile_n = _pick_tiles(rows, D, per_shard, tile_n, soft_budget, logit_bytes)
    row_tiles = rows // tile_m
    tiles_per_shard = per_shard // tile_n

    # bf16 into the MXU halves the dominant candidate HBM stream; accumulation
    # stays f32 inside the kernel.  Candidates are pre-transposed so the MXU
    # RHS is contracted on its leading dim (no per-tile XLU transpose).
    x = jnp.concatenate([input_image, input_text], axis=0).astype(jnp.bfloat16)
    a = all_target.T.astype(jnp.bfloat16)                          # (D, N)
    scale_arr = jnp.asarray(logit_scale, jnp.float32).reshape((1,))

    cost = pl.CostEstimate(
        flops=2 * rows * N * D,
        transcendentals=rows * N,
        bytes_accessed=int(N * D * 2 * row_tiles + rows * N * logit_bytes + rows * D * 2),
    )

    logits, part_lse = pl.pallas_call(
        _kd_clip_kernel,
        out_shape=(
            jax.ShapeDtypeStruct((rows, N), logits_dtype),
            jax.ShapeDtypeStruct((num_shards, rows, 1), jnp.float32),
        ),
        grid=(num_shards, row_tiles, tiles_per_shard),
        in_specs=[
            pl.BlockSpec(memory_space=pltpu.MemorySpace.SMEM),              # scale
            pl.BlockSpec((tile_m, D), lambda s, r, j: (r, 0)),              # X rows
            pl.BlockSpec((D, tile_n),
                         lambda s, r, j: (0, s * tiles_per_shard + j)),     # candidates
        ],
        out_specs=(
            pl.BlockSpec((tile_m, tile_n),
                         lambda s, r, j: (r, s * tiles_per_shard + j)),     # logits
            pl.BlockSpec((1, tile_m, 1), lambda s, r, j: (s, r, 0)),        # partial lse
        ),
        scratch_shapes=[
            pltpu.VMEM((tile_m, 1), jnp.float32),   # running max
            pltpu.VMEM((tile_m, 1), jnp.float32),   # running sum
        ],
        compiler_params=pltpu.CompilerParams(
            dimension_semantics=("parallel", "parallel", "arbitrary"),
            vmem_limit_bytes=vmem_limit),
        cost_estimate=cost,
    )(scale_arr, x, a)

    # Merge per-shard partial logsumexp stats (trivial when num_shards == 1).
    p_lse = part_lse[:, :, 0]                                # (num_shards, rows)
    m = jnp.max(p_lse, axis=0)
    lse = m + jnp.log(jnp.sum(jnp.exp(p_lse - m), axis=0))   # (rows,)

    # Label logit = diagonal of the logits the kernel already wrote:
    # label for stacked row r is column (r mod B).
    rows_idx = jnp.arange(rows)
    cols_idx = jnp.concatenate([jnp.arange(B), jnp.arange(B)])
    lab = logits[rows_idx, cols_idx].astype(jnp.float32)     # (rows,)

    per_row_loss = lse - lab
    logits_per_image = logits[:B]
    logits_per_text = logits[B:]
    image_loss = jnp.mean(per_row_loss[:B])
    text_loss = jnp.mean(per_row_loss[B:])
    total_loss = (image_loss + text_loss) / 2.0
    labels = jnp.arange(B, dtype=jnp.int32)

    return {
        "loss": total_loss,
        "image_loss": image_loss,
        "text_loss": text_loss,
        "logits_per_image": logits_per_image,
        "logits_per_text": logits_per_text,
        "targets": labels,
    }


# --------------------------------------------------------------------------- #
# Pure-JAX reference (on the same bf16-rounded operands, f32 math)
# --------------------------------------------------------------------------- #
def _reference(input_image, input_text, target, memory_bank, logit_scale):
    xi = input_image.astype(jnp.bfloat16).astype(jnp.float32)
    xt = input_text.astype(jnp.bfloat16).astype(jnp.float32)
    at = jnp.concatenate([target, memory_bank], axis=0)
    at = at.astype(jnp.bfloat16).astype(jnp.float32)

    logits_i = logit_scale * jnp.dot(xi, at.T, precision=lax.Precision.HIGHEST)
    logits_t = logit_scale * jnp.dot(xt, at.T, precision=lax.Precision.HIGHEST)
    labels = jnp.arange(xi.shape[0])

    def ce(lg):
        lse = jax.scipy.special.logsumexp(lg, axis=-1)
        labl = lg[jnp.arange(lg.shape[0]), labels]
        return jnp.mean(lse - labl)

    il, tl = ce(logits_i), ce(logits_t)
    return (il + tl) / 2.0, il, tl, logits_i, logits_t


if __name__ == "__main__":
    # Small, deterministic shapes consistent with the module's forward pass.
    B = 8            # batch
    D = 128          # embed_size
    SIZE = 2040      # memory bank size (B + SIZE = 2048 candidate rows)

    key = jax.random.PRNGKey(0)
    k_img, k_txt, k_tgt, k_mb = jax.random.split(key, 4)

    input_image = jax.random.normal(k_img, (B, D), jnp.float32)
    input_text = jax.random.normal(k_txt, (B, D), jnp.float32)
    target = jax.random.normal(k_tgt, (B, D), jnp.float32)
    target = target / jnp.linalg.norm(target, axis=-1, keepdims=True)

    # Memory bank init mirrors torch.rand(...) then row-normalize.
    mb = jax.random.uniform(k_mb, (SIZE, D), jnp.float32)
    memory_bank = mb / jnp.linalg.norm(mb, axis=-1, keepdims=True)

    logit_scale = jnp.float32(14.285)

    out = kd_clip_momentum_memory_bank_loss(
        input_image, input_text, target, memory_bank, logit_scale)
    jax.block_until_ready(out)

    # Correctness check against the bf16-rounded pure-JAX reference.
    ref_loss, ref_il, ref_tl, ref_li, ref_lt = _reference(
        input_image, input_text, target, memory_bank, logit_scale)
    np.testing.assert_allclose(np.asarray(out["logits_per_image"]),
                               np.asarray(ref_li), rtol=1e-2, atol=1e-2)
    np.testing.assert_allclose(np.asarray(out["logits_per_text"]),
                               np.asarray(ref_lt), rtol=1e-2, atol=1e-2)
    np.testing.assert_allclose(np.asarray(out["loss"]),
                               np.asarray(ref_loss), rtol=1e-2, atol=1e-2)
    np.testing.assert_allclose(np.asarray(out["image_loss"]),
                               np.asarray(ref_il), rtol=1e-2, atol=1e-2)
    np.testing.assert_allclose(np.asarray(out["text_loss"]),
                               np.asarray(ref_tl), rtol=1e-2, atol=1e-2)

    print("KERNEL_OK")
</pallas_src>

<mosaic_0001>
module attributes {stable_mosaic.version = 11 : i64} {
  func.func @_kd_clip_kernel(%arg0: i32, %arg1: i32, %arg2: i32, %arg3: memref<1xf32, #tpu.memory_space<smem>>, %arg4: memref<16x128xbf16, #tpu.memory_space<vmem>>, %arg5: memref<128x2048xbf16, #tpu.memory_space<vmem>>, %arg6: memref<16x2048xf32, #tpu.memory_space<vmem>>, %arg7: memref<1x16x1xf32, #tpu.memory_space<vmem>>, %arg8: memref<16x1xf32, #tpu.memory_space<vmem>>, %arg9: memref<16x1xf32, #tpu.memory_space<vmem>>) attributes {dimension_semantics = [#tpu.dimension_semantics<parallel>, #tpu.dimension_semantics<parallel>, #tpu.dimension_semantics<arbitrary>], iteration_bounds = array<i64: 1, 1, 1>, scalar_prefetch = 0 : i64, scratch_operands = 2 : i64, tpu.core_type = #tpu.core_type<tc>, window_params = [{transform_indices = @transform_0, window_bounds = array<i64: 1>}, {transform_indices = @transform_1, window_bounds = array<i64: 16, 128>}, {transform_indices = @transform_2, window_bounds = array<i64: 128, 2048>}, {transform_indices = @transform_3, window_bounds = array<i64: 16, 2048>}, {transform_indices = @transform_4, window_bounds = array<i64: 1, 16, 1>}]} {
    %c0_i32 = arith.constant 0 : i32
    %0 = arith.cmpi eq, %arg2, %c0_i32 : i32
    %1 = arith.extui %0 : i1 to i32
    %c0_i32_0 = arith.constant 0 : i32
    %2 = arith.cmpi ne, %1, %c0_i32_0 : i32
    scf.if %2 {
      %cst_21 = arith.constant 0xFF800000 : f32
      %30 = vector.broadcast %cst_21 : f32 to vector<16x1xf32>
      %c0_22 = arith.constant 0 : index
      %c0_23 = arith.constant 0 : index
      %31 = vector.load %arg8[%c0_22, %c0_23] : memref<16x1xf32, #tpu.memory_space<vmem>>, vector<16x1xf32>
      tpu.vector_store %arg8[%c0_22, %c0_23], %30 {strides = array<i32>} : memref<16x1xf32, #tpu.memory_space<vmem>>, vector<16x1xf32>,
      %cst_24 = arith.constant 0.000000e+00 : f32
      %32 = vector.broadcast %cst_24 : f32 to vector<16x1xf32>
      %c0_25 = arith.constant 0 : index
      %c0_26 = arith.constant 0 : index
      %33 = vector.load %arg9[%c0_25, %c0_26] : memref<16x1xf32, #tpu.memory_space<vmem>>, vector<16x1xf32>
      tpu.vector_store %arg9[%c0_25, %c0_26], %32 {strides = array<i32>} : memref<16x1xf32, #tpu.memory_space<vmem>>, vector<16x1xf32>,
    } else {
    }
    %c0 = arith.constant 0 : index
    %3 = memref.load %arg3[%c0] : memref<1xf32, #tpu.memory_space<smem>>
    %c0_1 = arith.constant 0 : index
    %c0_2 = arith.constant 0 : index
    %4 = vector.load %arg4[%c0_1, %c0_2] : memref<16x128xbf16, #tpu.memory_space<vmem>>, vector<16x128xbf16>
    %c0_3 = arith.constant 0 : index
    %c0_4 = arith.constant 0 : index
    %5 = vector.load %arg5[%c0_3, %c0_4] : memref<128x2048xbf16, #tpu.memory_space<vmem>>, vector<128x2048xbf16>
    %cst = arith.constant dense<0.000000e+00> : vector<16x2048xf32>
    %6 = tpu.matmul %4, %5, %cst {dimension_numbers = #tpu.dot_dimension_numbers<[1], [0], [0], [1], [0, 0, 1, 1], [], []>} : vector<16x128xbf16>, vector<128x2048xbf16>, vector<16x2048xf32> -> vector<16x2048xf32>
    %7 = vector.broadcast %3 : f32 to vector<16x2048xf32>
    %8 = arith.mulf %7, %6 : vector<16x2048xf32>
    %c0_5 = arith.constant 0 : index
    %c0_6 = arith.constant 0 : index
    %9 = vector.load %arg6[%c0_5, %c0_6] : memref<16x2048xf32, #tpu.memory_space<vmem>>, vector<16x2048xf32>
    tpu.vector_store %arg6[%c0_5, %c0_6], %8 {strides = array<i32>} : memref<16x2048xf32, #tpu.memory_space<vmem>>, vector<16x2048xf32>,
    %c0_7 = arith.constant 0 : index
    %c0_8 = arith.constant 0 : index
    %10 = vector.load %arg8[%c0_7, %c0_8] : memref<16x1xf32, #tpu.memory_space<vmem>>, vector<16x1xf32>
    %cst_9 = arith.constant dense<0xFF800000> : vector<16xf32>
    %11 = vector.multi_reduction <maximumf>, %8, %cst_9 [1] : vector<16x2048xf32> to vector<16xf32>
    %12 = vector.shape_cast %11 : vector<16xf32> to vector<16x1xf32>
    %13 = arith.maximumf %10, %12 : vector<16x1xf32>
    %c0_10 = arith.constant 0 : index
    %c0_11 = arith.constant 0 : index
    %14 = vector.load %arg9[%c0_10, %c0_11] : memref<16x1xf32, #tpu.memory_space<vmem>>, vector<16x1xf32>
    %c0_12 = arith.constant 0 : index
    %c0_13 = arith.constant 0 : index
    %15 = vector.load %arg8[%c0_12, %c0_13] : memref<16x1xf32, #tpu.memory_space<vmem>>, vector<16x1xf32>
    %16 = arith.subf %15, %13 : vector<16x1xf32>
    %17 = math.exp %16 : vector<16x1xf32>
    %18 = arith.mulf %14, %17 : vector<16x1xf32>
    %19 = vector.broadcast %13 : vector<16x1xf32> to vector<16x2048xf32>
    %20 = arith.subf %8, %19 : vector<16x2048xf32>
    %21 = math.exp %20 : vector<16x2048xf32>
    %cst_14 = arith.constant dense<0.000000e+00> : vector<16xf32>
    %22 = vector.multi_reduction <add>, %21, %cst_14 [1] : vector<16x2048xf32> to vector<16xf32>
    %23 = vector.shape_cast %22 : vector<16xf32> to vector<16x1xf32>
    %24 = arith.addf %18, %23 : vector<16x1xf32>
    %c0_15 = arith.constant 0 : index
    %c0_16 = arith.constant 0 : index
    %25 = vector.load %arg9[%c0_15, %c0_16] : memref<16x1xf32, #tpu.memory_space<vmem>>, vector<16x1xf32>
    tpu.vector_store %arg9[%c0_15, %c0_16], %24 {strides = array<i32>} : memref<16x1xf32, #tpu.memory_space<vmem>>, vector<16x1xf32>,
    %c0_17 = arith.constant 0 : index
    %c0_18 = arith.constant 0 : index
    %26 = vector.load %arg8[%c0_17, %c0_18] : memref<16x1xf32, #tpu.memory_space<vmem>>, vector<16x1xf32>
    tpu.vector_store %arg8[%c0_17, %c0_18], %13 {strides = array<i32>} : memref<16x1xf32, #tpu.memory_space<vmem>>, vector<16x1xf32>,
    %c0_i32_19 = arith.constant 0 : i32
    %27 = arith.cmpi eq, %arg2, %c0_i32_19 : i32
    %28 = arith.extui %27 : i1 to i32
    %c0_i32_20 = arith.constant 0 : i32
    %29 = arith.cmpi ne, %28, %c0_i32_20 : i32
    scf.if %29 {
      %c0_21 = arith.constant 0 : index
      %c0_22 = arith.constant 0 : index
      %30 = vector.load %arg8[%c0_21, %c0_22] : memref<16x1xf32, #tpu.memory_space<vmem>>, vector<16x1xf32>
      %c0_23 = arith.constant 0 : index
      %c0_24 = arith.constant 0 : index
      %31 = vector.load %arg9[%c0_23, %c0_24] : memref<16x1xf32, #tpu.memory_space<vmem>>, vector<16x1xf32>
      %32 = math.log %31 : vector<16x1xf32>
      %33 = arith.addf %30, %32 : vector<16x1xf32>
      %34 = vector.shape_cast %33 : vector<16x1xf32> to vector<1x16x1xf32>
      %c0_25 = arith.constant 0 : index
      %c0_26 = arith.constant 0 : index
      %c0_27 = arith.constant 0 : index
      %35 = vector.load %arg7[%c0_25, %c0_26, %c0_27] : memref<1x16x1xf32, #tpu.memory_space<vmem>>, vector<1x16x1xf32>
      tpu.vector_store %arg7[%c0_25, %c0_26, %c0_27], %34 {strides = array<i32>} : memref<1x16x1xf32, #tpu.memory_space<vmem>>, vector<1x16x1xf32>,
    } else {
    }
    return
  }
  func.func @transform_0(%arg0: i32, %arg1: i32, %arg2: i32) -> i32 {
    %c0_i32 = arith.constant 0 : i32
    %c0_i32_0 = arith.constant 0 : i32
    return %c0_i32 : i32
  }
  func.func @transform_1(%arg0: i32, %arg1: i32, %arg2: i32) -> (i32, i32) {
    %c0_i32 = arith.constant 0 : i32
    %c0_i32_0 = arith.constant 0 : i32
    return %arg1, %c0_i32 : i32, i32
  }
  func.func @transform_2(%arg0: i32, %arg1: i32, %arg2: i32) -> (i32, i32) {
    %c1_i32 = arith.constant 1 : i32
    %0 = arith.muli %arg0, %c1_i32 : i32
    %1 = arith.addi %0, %arg2 : i32
    %c0_i32 = arith.constant 0 : i32
    %c0_i32_0 = arith.constant 0 : i32
    return %c0_i32, %1 : i32, i32
  }
  func.func @transform_3(%arg0: i32, %arg1: i32, %arg2: i32) -> (i32, i32) {
    %c1_i32 = arith.constant 1 : i32
    %0 = arith.muli %arg0, %c1_i32 : i32
    %1 = arith.addi %0, %arg2 : i32
    %c0_i32 = arith.constant 0 : i32
    return %arg1, %1 : i32, i32
  }
  func.func @transform_4(%arg0: i32, %arg1: i32, %arg2: i32) -> (i32, i32, i32) {
    %c0_i32 = arith.constant 0 : i32
    %c0_i32_0 = arith.constant 0 : i32
    return %arg0, %arg1, %c0_i32 : i32, i32, i32
  }
}

</mosaic_0001>

<llo_original>
// kernel: tpu_custom_call.1
$region0: #{tpu_custom_call.1}
  #allocation0 [shape = 'u32[]', space=smem, size = 0x4, offset = 0x4, fixed_abs, tag = 'smem constant byte address 0x4 - core index']
  #allocation1 [shape = 'u32[72,128]{1,0:T(1,128)}', space=vmem, size = 0x9000, scoped, tag = 'internal scratch']
  #allocation2 [shape = 'f32[16,1]{1,0:T(8,128)}', space=vmem, size = 0x2000, scoped, tag = 'scratch operand']
  #allocation3 [shape = 'f32[16,1]{1,0:T(8,128)}', space=vmem, size = 0x2000, scoped, tag = 'scratch operand']
  #allocation4 [shape = 'f32[1]{0:T(128)S(6)}', space=smem, size = 0x200, scoped, tag = 'scoped memory for tpu_custom_call.1']
  %s0 = inlined_call_operand.<no memory space> [shape: f32[1], index: 0, kind: input, shape index: {}]
  %s1 = inlined_call_operand.hbm [shape: bf16[16,128], index: 1, kind: input, shape index: {}]
  %s2 = inlined_call_operand.hbm [shape: bf16[128,2048], index: 2, kind: input, shape index: {}]
  %s3 = inlined_call_operand.hbm [shape: f32[16,2048], index: 3, kind: output, shape index: {0}]
  %s4 = inlined_call_operand.vmem [shape: f32[1,16,1], index: 4, kind: output, shape index: {1}]
  %5 = xla_tuple %s3, %s4
  %s6 = sld [smem:[#allocation0]]
  $region46: #{tpu_custom_call.1} parent=0
    _
  %s8 = ssub.s32 1, %s6
  %s9 = scalar_select 0, %s8, %s6
  %10 = sst [smem:[#allocation4]] %s0
  $region1: #{tpu_custom_call.1} parent=0
    #allocation5 [shape = 'u8[4096]{0}', space=vmem, size = 0x1000, scoped, tag = 'input window, operand 1, single buffered']
    #allocation6 [shape = 's32[1]{0}', space=sflag, size = 0x4, scoped, tag = 'scoped memory for tpu_custom_call.1']
    #allocation7 [shape = 's32[1]{0}', space=sflag, size = 0x4, scoped, tag = 'scoped memory for tpu_custom_call.1']
    #allocation8 [shape = 'u8[524288]{0}', space=vmem, size = 0x80000, scoped, tag = 'input window, operand 2, single buffered']
    #allocation9 [shape = 's32[1]{0}', space=sflag, size = 0x4, scoped, tag = 'scoped memory for tpu_custom_call.1']
    #allocation10 [shape = 'u8[131072]{0}', space=vmem, size = 0x20000, scoped, tag = 'output window, operand 0, single buffered']
    %11 = vsyncpa [#allocation6], 0
    %12 = vsyncpa [#allocation9], 0
    %13 = vsyncpa [#allocation7], 0
    // Predicated region
    $region2: #{tpu_custom_call.1} parent=1 // pred_check
      _
    $region3: #{tpu_custom_call.1} parent=1 // pred_check_branch
      %15 = sbr.rel (0) target = $region5
    $region4: #{tpu_custom_call.1} parent=1 // pred_region
      _
    $region5: #{tpu_custom_call.1} parent=1 // pred_fallthru
      _
    // Predicated region
    $region6: #{tpu_custom_call.1} parent=1 // pred_check
      _
    $region7: #{tpu_custom_call.1} parent=1 // pred_check_branch
      %17 = sbr.rel (0) target = $region9
    $region8: #{tpu_custom_call.1} parent=1 // pred_region
      %19 = vsyncadd [#allocation6], 0
      %s20 = sshll.u32 %s1, 4
      %s21 = int_to_ptr.hbm [resolvable:$true] %s20
      %s22 = sshll.u32 [#allocation5], 4
      %s23 = int_to_ptr.vmem [resolvable:$true] %s22
      %28 = dma.hbm_to_vmem [thread:$0]  %s21, 128, %s23, [#allocation6], 64, 64, 4
    $region9: #{tpu_custom_call.1} parent=1 // pred_fallthru
      _
    // Predicated region
    $region10: #{tpu_custom_call.1} parent=1 // pred_check
      _
    $region11: #{tpu_custom_call.1} parent=1 // pred_check_branch
      %30 = sbr.rel (0) target = $region13
    $region12: #{tpu_custom_call.1} parent=1 // pred_region
      %s31 = sadd.s32 0, 0
      %s32 = smul.u32 16, %s31
      %34 = vsyncadd [#allocation9], 0
      %s35 = smul.addr %s32, 4
      %s36 = scalar_lea.hbm %s2, %s35
      %s37 = sshll.u32 %s36, 4
      %s38 = int_to_ptr.hbm [resolvable:$true] %s37
      %s39 = sshll.u32 [#allocation8], 4
      %s40 = int_to_ptr.vmem [resolvable:$true] %s39
      %45 = dma.hbm_to_vmem [thread:$0]  %s38, 16384, %s40, [#allocation9], 1024, 1024, 64
    $region13: #{tpu_custom_call.1} parent=1 // pred_fallthru
      _
    // Predicated region
    $region14: #{tpu_custom_call.1} parent=1 // pred_check
      _
    $region15: #{tpu_custom_call.1} parent=1 // pred_check_branch
      %47 = sbr.rel (0) target = $region17
    $region16: #{tpu_custom_call.1} parent=1 // pred_region
      %49 = dma.done [#allocation6], 128
    $region17: #{tpu_custom_call.1} parent=1 // pred_fallthru
      _
    // Predicated region
    $region18: #{tpu_custom_call.1} parent=1 // pred_check
      _
    $region19: #{tpu_custom_call.1} parent=1 // pred_check_branch
      %51 = sbr.rel (0) target = $region21
    $region20: #{tpu_custom_call.1} parent=1 // pred_region
      %53 = dma.done [#allocation9], 16384
    $region21: #{tpu_custom_call.1} parent=1 // pred_fallthru
      _
    %s54 = sadd.s32 0, 0
    %s55 = smul.u32 16, %s54
    %s56 = sadd.s32 0, 0
    %s57 = smul.u32 16, %s56
    %p58 = scmp.eq.s32.totalorder 0, 0
    // Predicated region
    $region22: #{tpu_custom_call.1} parent=1 // pred_check
      %p59 = pneg %p58
    $region23: #{tpu_custom_call.1} parent=1 // pred_check_branch
      %61 = sbr.rel (%p59) target = $region25
    $region24: #{tpu_custom_call.1} parent=1 // pred_region
      %vm62 = vcmask 7168
      %63 = vst.msk [vmem:[#allocation2] sm:$0xff] %vm62, -inf
      %64 = vst.msk [vmem:[#allocation2 + $0x8] sm:$0xff] %vm62, -inf
      %65 = vst.msk [vmem:[#allocation3] sm:$0xff] %vm62, 0.0
      %66 = vst.msk [vmem:[#allocation3 + $0x8] sm:$0xff] %vm62, 0.0
    $region25: #{tpu_custom_call.1} parent=1 // pred_fallthru
      _
    %s67 = sld [smem:[#allocation4]]
    %v68 = vld [vmem:[#allocation5] sm:$0xf]
    %v69 = vld [vmem:[#allocation5 + $0x4] sm:$0xf]
    %v70 = vld [vmem:[#allocation8] sm:$0xff]
    %v71 = vld [vmem:[#allocation8 + $0x8] sm:$0xff]
    %v72 = vld [vmem:[#allocation8 + $0x10] sm:$0xff]
    %v73 = vld [vmem:[#allocation8 + $0x18] sm:$0xff]
    %v74 = vld [vmem:[#allocation8 + $0x20] sm:$0xff]
    %v75 = vld [vmem:[#allocation8 + $0x28] sm:$0xff]
    %v76 = vld [vmem:[#allocation8 + $0x30] sm:$0xff]
    %v77 = vld [vmem:[#allocation8 + $0x38] sm:$0xff]
    %v78 = vld [vmem:[#allocation8 + $0x40] sm:$0xff]
    %v79 = vld [vmem:[#allocation8 + $0x48] sm:$0xff]
    %v80 = vld [vmem:[#allocation8 + $0x50] sm:$0xff]
    %v81 = vld [vmem:[#allocation8 + $0x58] sm:$0xff]
    %v82 = vld [vmem:[#allocation8 + $0x60] sm:$0xff]
    %v83 = vld [vmem:[#allocation8 + $0x68] sm:$0xff]
    %v84 = vld [vmem:[#allocation8 + $0x70] sm:$0xff]
    %v85 = vld [vmem:[#allocation8 + $0x78] sm:$0xff]
    %v86 = vld [vmem:[#allocation8 + $0x80] sm:$0xff]
    %v87 = vld [vmem:[#allocation8 + $0x88] sm:$0xff]
    %v88 = vld [vmem:[#allocation8 + $0x90] sm:$0xff]
    %v89 = vld [vmem:[#allocation8 + $0x98] sm:$0xff]
    %v90 = vld [vmem:[#allocation8 + $0xa0] sm:$0xff]
    %v91 = vld [vmem:[#allocation8 + $0xa8] sm:$0xff]
    %v92 = vld [vmem:[#allocation8 + $0xb0] sm:$0xff]
    %v93 = vld [vmem:[#allocation8 + $0xb8] sm:$0xff]
    %v94 = vld [vmem:[#allocation8 + $0xc0] sm:$0xff]
    %v95 = vld [vmem:[#allocation8 + $0xc8] sm:$0xff]
    %v96 = vld [vmem:[#allocation8 + $0xd0] sm:$0xff]
    %v97 = vld [vmem:[#allocation8 + $0xd8] sm:$0xff]
    %v98 = vld [vmem:[#allocation8 + $0xe0] sm:$0xff]
    %v99 = vld [vmem:[#allocation8 + $0xe8] sm:$0xff]
    %v100 = vld [vmem:[#allocation8 + $0xf0] sm:$0xff]
    %v101 = vld [vmem:[#allocation8 + $0xf8] sm:$0xff]
    %v102 = vld [vmem:[#allocation8 + $0x100] sm:$0xff]
    %v103 = vld [vmem:[#allocation8 + $0x108] sm:$0xff]
    %v104 = vld [vmem:[#allocation8 + $0x110] sm:$0xff]
    %v105 = vld [vmem:[#allocation8 + $0x118] sm:$0xff]
    %v106 = vld [vmem:[#allocation8 + $0x120] sm:$0xff]
    %v107 = vld [vmem:[#allocation8 + $0x128] sm:$0xff]
    %v108 = vld [vmem:[#allocation8 + $0x130] sm:$0xff]
    %v109 = vld [vmem:[#allocation8 + $0x138] sm:$0xff]
    %v110 = vld [vmem:[#allocation8 + $0x140] sm:$0xff]
    %v111 = vld [vmem:[#allocation8 + $0x148] sm:$0xff]
    %v112 = vld [vmem:[#allocation8 + $0x150] sm:$0xff]
    %v113 = vld [vmem:[#allocation8 + $0x158] sm:$0xff]
    %v114 = vld [vmem:[#allocation8 + $0x160] sm:$0xff]
    %v115 = vld [vmem:[#allocation8 + $0x168] sm:$0xff]
    %v116 = vld [vmem:[#allocation8 + $0x170] sm:$0xff]
    %v117 = vld [vmem:[#allocation8 + $0x178] sm:$0xff]
    %v118 = vld [vmem:[#allocation8 + $0x180] sm:$0xff]
    %v119 = vld [vmem:[#allocation8 + $0x188] sm:$0xff]
    %v120 = vld [vmem:[#allocation8 + $0x190] sm:$0xff]
    %v121 = vld [vmem:[#allocation8 + $0x198] sm:$0xff]
    %v122 = vld [vmem:[#allocation8 + $0x1a0] sm:$0xff]
    %v123 = vld [vmem:[#allocation8 + $0x1a8] sm:$0xff]
    %v124 = vld [vmem:[#allocation8 + $0x1b0] sm:$0xff]
    %v125 = vld [vmem:[#allocation8 + $0x1b8] sm:$0xff]
    %v126 = vld [vmem:[#allocation8 + $0x1c0] sm:$0xff]
    %v127 = vld [vmem:[#allocation8 + $0x1c8] sm:$0xff]
    %v128 = vld [vmem:[#allocation8 + $0x1d0] sm:$0xff]
    %v129 = vld [vmem:[#allocation8 + $0x1d8] sm:$0xff]
    %v130 = vld [vmem:[#allocation8 + $0x1e0] sm:$0xff]
    %v131 = vld [vmem:[#allocation8 + $0x1e8] sm:$0xff]
    %v132 = vld [vmem:[#allocation8 + $0x1f0] sm:$0xff]
    %v133 = vld [vmem:[#allocation8 + $0x1f8] sm:$0xff]
    %v134 = vld [vmem:[#allocation8 + $0x200] sm:$0xff]
    %v135 = vld [vmem:[#allocation8 + $0x208] sm:$0xff]
    %v136 = vld [vmem:[#allocation8 + $0x210] sm:$0xff]
    %v137 = vld [vmem:[#allocation8 + $0x218] sm:$0xff]
    %v138 = vld [vmem:[#allocation8 + $0x220] sm:$0xff]
    %v139 = vld [vmem:[#allocation8 + $0x228] sm:$0xff]
    %v140 = vld [vmem:[#allocation8 + $0x230] sm:$0xff]
    %v141 = vld [vmem:[#allocation8 + $0x238] sm:$0xff]
    %v142 = vld [vmem:[#allocation8 + $0x240] sm:$0xff]
    %v143 = vld [vmem:[#allocation8 + $0x248] sm:$0xff]
    %v144 = vld [vmem:[#allocation8 + $0x250] sm:$0xff]
    %v145 = vld [vmem:[#allocation8 + $0x258] sm:$0xff]
    %v146 = vld [vmem:[#allocation8 + $0x260] sm:$0xff]
    %v147 = vld [vmem:[#allocation8 + $0x268] sm:$0xff]
    %v148 = vld [vmem:[#allocation8 + $0x270] sm:$0xff]
    %v149 = vld [vmem:[#allocation8 + $0x278] sm:$0xff]
    %v150 = vld [vmem:[#allocation8 + $0x280] sm:$0xff]
    %v151 = vld [vmem:[#allocation8 + $0x288] sm:$0xff]
    %v152 = vld [vmem:[#allocation8 + $0x290] sm:$0xff]
    %v153 = vld [vmem:[#allocation8 + $0x298] sm:$0xff]
    %v154 = vld [vmem:[#allocation8 + $0x2a0] sm:$0xff]
    %v155 = vld [vmem:[#allocation8 + $0x2a8] sm:$0xff]
    %v156 = vld [vmem:[#allocation8 + $0x2b0] sm:$0xff]
    %v157 = vld [vmem:[#allocation8 + $0x2b8] sm:$0xff]
    %v158 = vld [vmem:[#allocation8 + $0x2c0] sm:$0xff]
    %v159 = vld [vmem:[#allocation8 + $0x2c8] sm:$0xff]
    %v160 = vld [vmem:[#allocation8 + $0x2d0] sm:$0xff]
    %v161 = vld [vmem:[#allocation8 + $0x2d8] sm:$0xff]
    %v162 = vld [vmem:[#allocation8 + $0x2e0] sm:$0xff]
    %v163 = vld [vmem:[#allocation8 + $0x2e8] sm:$0xff]
    %v164 = vld [vmem:[#allocation8 + $0x2f0] sm:$0xff]
    %v165 = vld [vmem:[#allocation8 + $0x2f8] sm:$0xff]
    %v166 = vld [vmem:[#allocation8 + $0x300] sm:$0xff]
    %v167 = vld [vmem:[#allocation8 + $0x308] sm:$0xff]
    %v168 = vld [vmem:[#allocation8 + $0x310] sm:$0xff]
    %v169 = vld [vmem:[#allocation8 + $0x318] sm:$0xff]
    %v170 = vld [vmem:[#allocation8 + $0x320] sm:$0xff]
    %v171 = vld [vmem:[#allocation8 + $0x328] sm:$0xff]
    %v172 = vld [vmem:[#allocation8 + $0x330] sm:$0xff]
    %v173 = vld [vmem:[#allocation8 + $0x338] sm:$0xff]
    %v174 = vld [vmem:[#allocation8 + $0x340] sm:$0xff]
    %v175 = vld [vmem:[#allocation8 + $0x348] sm:$0xff]
    %v176 = vld [vmem:[#allocation8 + $0x350] sm:$0xff]
    %v177 = vld [vmem:[#allocation8 + $0x358] sm:$0xff]
    %v178 = vld [vmem:[#allocation8 + $0x360] sm:$0xff]
    %v179 = vld [vmem:[#allocation8 + $0x368] sm:$0xff]
    %v180 = vld [vmem:[#allocation8 + $0x370] sm:$0xff]
    %v181 = vld [vmem:[#allocation8 + $0x378] sm:$0xff]
    %v182 = vld [vmem:[#allocation8 + $0x380] sm:$0xff]
    %v183 = vld [vmem:[#allocation8 + $0x388] sm:$0xff]
    %v184 = vld [vmem:[#allocation8 + $0x390] sm:$0xff]
    %v185 = vld [vmem:[#allocation8 + $0x398] sm:$0xff]
    %v186 = vld [vmem:[#allocation8 + $0x3a0] sm:$0xff]
    %v187 = vld [vmem:[#allocation8 + $0x3a8] sm:$0xff]
    %v188 = vld [vmem:[#allocation8 + $0x3b0] sm:$0xff]
    %v189 = vld [vmem:[#allocation8 + $0x3b8] sm:$0xff]
    %v190 = vld [vmem:[#allocation8 + $0x3c0] sm:$0xff]
    %v191 = vld [vmem:[#allocation8 + $0x3c8] sm:$0xff]
    %v192 = vld [vmem:[#allocation8 + $0x3d0] sm:$0xff]
    %v193 = vld [vmem:[#allocation8 + $0x3d8] sm:$0xff]
    %v194 = vld [vmem:[#allocation8 + $0x3e0] sm:$0xff]
    %v195 = vld [vmem:[#allocation8 + $0x3e8] sm:$0xff]
    %v196 = vld [vmem:[#allocation8 + $0x3f0] sm:$0xff]
    %v197 = vld [vmem:[#allocation8 + $0x3f8] sm:$0xff]
    %v200 = vunpack.c.l.b16 %v68
    %v201 = vunpack.c.l.b16 %v69
    %v202 = vpack.c.b16 %v201, %v200
    %v332 = vunpack.c.l.b16 %v70
    %v333 = vunpack.c.h.b16 %v70
    %v334 = vunpack.c.l.b16 %v71
    %v335 = vunpack.c.h.b16 %v71
    %v336 = vunpack.c.l.b16 %v72
    %v337 = vunpack.c.h.b16 %v72
    %v338 = vunpack.c.l.b16 %v73
    %v339 = vunpack.c.h.b16 %v73
    %v340 = vunpack.c.l.b16 %v74
    %v341 = vunpack.c.h.b16 %v74
    %v342 = vunpack.c.l.b16 %v75
    %v343 = vunpack.c.h.b16 %v75
    %v344 = vunpack.c.l.b16 %v76
    %v345 = vunpack.c.h.b16 %v76
    %v346 = vunpack.c.l.b16 %v77
    %v347 = vunpack.c.h.b16 %v77
    %v348 = vunpack.c.l.b16 %v78
    %v349 = vunpack.c.h.b16 %v78
    %v350 = vunpack.c.l.b16 %v79
    %v351 = vunpack.c.h.b16 %v79
    %v352 = vunpack.c.l.b16 %v80
    %v353 = vunpack.c.h.b16 %v80
    %v354 = vunpack.c.l.b16 %v81
    %v355 = vunpack.c.h.b16 %v81
    %v356 = vunpack.c.l.b16 %v82
    %v357 = vunpack.c.h.b16 %v82
    %v358 = vunpack.c.l.b16 %v83
    %v359 = vunpack.c.h.b16 %v83
    %v360 = vunpack.c.l.b16 %v84
    %v361 = vunpack.c.h.b16 %v84
    %v362 = vunpack.c.l.b16 %v85
    %v363 = vunpack.c.h.b16 %v85
    %v364 = vunpack.c.l.b16 %v86
    %v365 = vunpack.c.h.b16 %v86
    %v366 = vunpack.c.l.b16 %v87
    %v367 = vunpack.c.h.b16 %v87
    %v368 = vunpack.c.l.b16 %v88
    %v369 = vunpack.c.h.b16 %v88
    %v370 = vunpack.c.l.b16 %v89
    %v371 = vunpack.c.h.b16 %v89
    %v372 = vunpack.c.l.b16 %v90
    %v373 = vunpack.c.h.b16 %v90
    %v374 = vunpack.c.l.b16 %v91
    %v375 = vunpack.c.h.b16 %v91
    %v376 = vunpack.c.l.b16 %v92
    %v377 = vunpack.c.h.b16 %v92
    %v378 = vunpack.c.l.b16 %v93
    %v379 = vunpack.c.h.b16 %v93
    %v380 = vunpack.c.l.b16 %v94
    %v381 = vunpack.c.h.b16 %v94
    %v382 = vunpack.c.l.b16 %v95
    %v383 = vunpack.c.h.b16 %v95
    %v384 = vunpack.c.l.b16 %v96
    %v385 = vunpack.c.h.b16 %v96
    %v386 = vunpack.c.l.b16 %v97
    %v387 = vunpack.c.h.b16 %v97
    %v388 = vunpack.c.l.b16 %v98
    %v389 = vunpack.c.h.b16 %v98
    %v390 = vunpack.c.l.b16 %v99
    %v391 = vunpack.c.h.b16 %v99
    %v392 = vunpack.c.l.b16 %v100
    %v393 = vunpack.c.h.b16 %v100
    %v394 = vunpack.c.l.b16 %v101
    %v395 = vunpack.c.h.b16 %v101
    %v396 = vunpack.c.l.b16 %v102
    %v397 = vunpack.c.h.b16 %v102
    %v398 = vunpack.c.l.b16 %v103
    %v399 = vunpack.c.h.b16 %v103
    %v400 = vunpack.c.l.b16 %v104
    %v401 = vunpack.c.h.b16 %v104
    %v402 = vunpack.c.l.b16 %v105
    %v403 = vunpack.c.h.b16 %v105
    %v404 = vunpack.c.l.b16 %v106
    %v405 = vunpack.c.h.b16 %v106
    %v406 = vunpack.c.l.b16 %v107
    %v407 = vunpack.c.h.b16 %v107
    %v408 = vunpack.c.l.b16 %v108
    %v409 = vunpack.c.h.b16 %v108
    %v410 = vunpack.c.l.b16 %v109
    %v411 = vunpack.c.h.b16 %v109
    %v412 = vunpack.c.l.b16 %v110
    %v413 = vunpack.c.h.b16 %v110
    %v414 = vunpack.c.l.b16 %v111
    %v415 = vunpack.c.h.b16 %v111
    %v416 = vunpack.c.l.b16 %v112
    %v417 = vunpack.c.h.b16 %v112
    %v418 = vunpack.c.l.b16 %v113
    %v419 = vunpack.c.h.b16 %v113
    %v420 = vunpack.c.l.b16 %v114
    %v421 = vunpack.c.h.b16 %v114
    %v422 = vunpack.c.l.b16 %v115
    %v423 = vunpack.c.h.b16 %v115
    %v424 = vunpack.c.l.b16 %v116
    %v425 = vunpack.c.h.b16 %v116
    %v426 = vunpack.c.l.b16 %v117
    %v427 = vunpack.c.h.b16 %v117
    %v428 = vunpack.c.l.b16 %v118
    %v429 = vunpack.c.h.b16 %v118
    %v430 = vunpack.c.l.b16 %v119
    %v431 = vunpack.c.h.b16 %v119
    %v432 = vunpack.c.l.b16 %v120
    %v433 = vunpack.c.h.b16 %v120
    %v434 = vunpack.c.l.b16 %v121
    %v435 = vunpack.c.h.b16 %v121
    %v436 = vunpack.c.l.b16 %v122
    %v437 = vunpack.c.h.b16 %v122
    %v438 = vunpack.c.l.b16 %v123
    %v439 = vunpack.c.h.b16 %v123
    %v440 = vunpack.c.l.b16 %v124
    %v441 = vunpack.c.h.b16 %v124
    %v442 = vunpack.c.l.b16 %v125
    %v443 = vunpack.c.h.b16 %v125
    %v444 = vunpack.c.l.b16 %v126
    %v445 = vunpack.c.h.b16 %v126
    %v446 = vunpack.c.l.b16 %v127
    %v447 = vunpack.c.h.b16 %v127
    %v448 = vunpack.c.l.b16 %v128
    %v449 = vunpack.c.h.b16 %v128
    %v450 = vunpack.c.l.b16 %v129
    %v451 = vunpack.c.h.b16 %v129
    %v452 = vunpack.c.l.b16 %v130
    %v453 = vunpack.c.h.b16 %v130
    %v454 = vunpack.c.l.b16 %v131
    %v455 = vunpack.c.h.b16 %v131
    %v456 = vunpack.c.l.b16 %v132
    %v457 = vunpack.c.h.b16 %v132
    %v458 = vunpack.c.l.b16 %v133
    %v459 = vunpack.c.h.b16 %v133
    %v460 = vunpack.c.l.b16 %v134
    %v461 = vunpack.c.h.b16 %v134
    %v462 = vunpack.c.l.b16 %v135
    %v463 = vunpack.c.h.b16 %v135
    %v464 = vunpack.c.l.b16 %v136
    %v465 = vunpack.c.h.b16 %v136
    %v466 = vunpack.c.l.b16 %v137
    %v467 = vunpack.c.h.b16 %v137
    %v468 = vunpack.c.l.b16 %v138
    %v469 = vunpack.c.h.b16 %v138
    %v470 = vunpack.c.l.b16 %v139
    %v471 = vunpack.c.h.b16 %v139
    %v472 = vunpack.c.l.b16 %v140
    %v473 = vunpack.c.h.b16 %v140
    %v474 = vunpack.c.l.b16 %v141
    %v475 = vunpack.c.h.b16 %v141
    %v476 = vunpack.c.l.b16 %v142
    %v477 = vunpack.c.h.b16 %v142
    %v478 = vunpack.c.l.b16 %v143
    %v479 = vunpack.c.h.b16 %v143
    %v480 = vunpack.c.l.b16 %v144
    %v481 = vunpack.c.h.b16 %v144
    %v482 = vunpack.c.l.b16 %v145
    %v483 = vunpack.c.h.b16 %v145
    %v484 = vunpack.c.l.b16 %v146
    %v485 = vunpack.c.h.b16 %v146
    %v486 = vunpack.c.l.b16 %v147
    %v487 = vunpack.c.h.b16 %v147
    %v488 = vunpack.c.l.b16 %v148
    %v489 = vunpack.c.h.b16 %v148
    %v490 = vunpack.c.l.b16 %v149
    %v491 = vunpack.c.h.b16 %v149
    %v492 = vunpack.c.l.b16 %v150
    %v493 = vunpack.c.h.b16 %v150
    %v494 = vunpack.c.l.b16 %v151
    %v495 = vunpack.c.h.b16 %v151
    %v496 = vunpack.c.l.b16 %v152
    %v497 = vunpack.c.h.b16 %v152
    %v498 = vunpack.c.l.b16 %v153
    %v499 = vunpack.c.h.b16 %v153
    %v500 = vunpack.c.l.b16 %v154
    %v501 = vunpack.c.h.b16 %v154
    %v502 = vunpack.c.l.b16 %v155
    %v503 = vunpack.c.h.b16 %v155
    %v504 = vunpack.c.l.b16 %v156
    %v505 = vunpack.c.h.b16 %v156
    %v506 = vunpack.c.l.b16 %v157
    %v507 = vunpack.c.h.b16 %v157
    %v508 = vunpack.c.l.b16 %v158
    %v509 = vunpack.c.h.b16 %v158
    %v510 = vunpack.c.l.b16 %v159
    %v511 = vunpack.c.h.b16 %v159
    %v512 = vunpack.c.l.b16 %v160
    %v513 = vunpack.c.h.b16 %v160
    %v514 = vunpack.c.l.b16 %v161
    %v515 = vunpack.c.h.b16 %v161
    %v516 = vunpack.c.l.b16 %v162
    %v517 = vunpack.c.h.b16 %v162
    %v518 = vunpack.c.l.b16 %v163
    %v519 = vunpack.c.h.b16 %v163
    %v520 = vunpack.c.l.b16 %v164
    %v521 = vunpack.c.h.b16 %v164
    %v522 = vunpack.c.l.b16 %v165
    %v523 = vunpack.c.h.b16 %v165
    %v524 = vunpack.c.l.b16 %v166
    %v525 = vunpack.c.h.b16 %v166
    %v526 = vunpack.c.l.b16 %v167
    %v527 = vunpack.c.h.b16 %v167
    %v528 = vunpack.c.l.b16 %v168
    %v529 = vunpack.c.h.b16 %v168
    %v530 = vunpack.c.l.b16 %v169
    %v531 = vunpack.c.h.b16 %v169
    %v532 = vunpack.c.l.b16 %v170
    %v533 = vunpack.c.h.b16 %v170
    %v534 = vunpack.c.l.b16 %v171
    %v535 = vunpack.c.h.b16 %v171
    %v536 = vunpack.c.l.b16 %v172
    %v537 = vunpack.c.h.b16 %v172
    %v538 = vunpack.c.l.b16 %v173
    %v539 = vunpack.c.h.b16 %v173
    %v540 = vunpack.c.l.b16 %v174
    %v541 = vunpack.c.h.b16 %v174
    %v542 = vunpack.c.l.b16 %v175
    %v543 = vunpack.c.h.b16 %v175
    %v544 = vunpack.c.l.b16 %v176
    %v545 = vunpack.c.h.b16 %v176
    %v546 = vunpack.c.l.b16 %v177
    %v547 = vunpack.c.h.b16 %v177
    %v548 = vunpack.c.l.b16 %v178
    %v549 = vunpack.c.h.b16 %v178
    %v550 = vunpack.c.l.b16 %v179
    %v551 = vunpack.c.h.b16 %v179
    %v552 = vunpack.c.l.b16 %v180
    %v553 = vunpack.c.h.b16 %v180
    %v554 = vunpack.c.l.b16 %v181
    %v555 = vunpack.c.h.b16 %v181
    %v556 = vunpack.c.l.b16 %v182
    %v557 = vunpack.c.h.b16 %v182
    %v558 = vunpack.c.l.b16 %v183
    %v559 = vunpack.c.h.b16 %v183
    %v560 = vunpack.c.l.b16 %v184
    %v561 = vunpack.c.h.b16 %v184
    %v562 = vunpack.c.l.b16 %v185
    %v563 = vunpack.c.h.b16 %v185
    %v564 = vunpack.c.l.b16 %v186
    %v565 = vunpack.c.h.b16 %v186
    %v566 = vunpack.c.l.b16 %v187
    %v567 = vunpack.c.h.b16 %v187
    %v568 = vunpack.c.l.b16 %v188
    %v569 = vunpack.c.h.b16 %v188
    %v570 = vunpack.c.l.b16 %v189
    %v571 = vunpack.c.h.b16 %v189
    %v572 = vunpack.c.l.b16 %v190
    %v573 = vunpack.c.h.b16 %v190
    %v574 = vunpack.c.l.b16 %v191
    %v575 = vunpack.c.h.b16 %v191
    %v576 = vunpack.c.l.b16 %v192
    %v577 = vunpack.c.h.b16 %v192
    %v578 = vunpack.c.l.b16 %v193
    %v579 = vunpack.c.h.b16 %v193
    %v580 = vunpack.c.l.b16 %v194
    %v581 = vunpack.c.h.b16 %v194
    %v582 = vunpack.c.l.b16 %v195
    %v583 = vunpack.c.h.b16 %v195
    %v584 = vunpack.c.l.b16 %v196
    %v585 = vunpack.c.h.b16 %v196
    %v586 = vunpack.c.l.b16 %v197
    %v587 = vunpack.c.h.b16 %v197
    %v588 = vpack.c.b16 %v348, %v332
    %v589 = vpack.c.b16 %v349, %v333
    %v590 = vpack.c.b16 %v350, %v334
    %v591 = vpack.c.b16 %v351, %v335
    %v592 = vpack.c.b16 %v352, %v336
    %v593 = vpack.c.b16 %v353, %v337
    %v594 = vpack.c.b16 %v354, %v338
    %v595 = vpack.c.b16 %v355, %v339
    %v596 = vpack.c.b16 %v356, %v340
    %v597 = vpack.c.b16 %v357, %v341
    %v598 = vpack.c.b16 %v358, %v342
    %v599 = vpack.c.b16 %v359, %v343
    %v600 = vpack.c.b16 %v360, %v344
    %v601 = vpack.c.b16 %v361, %v345
    %v602 = vpack.c.b16 %v362, %v346
    %v603 = vpack.c.b16 %v363, %v347
    %v604 = vpack.c.b16 %v380, %v364
    %v605 = vpack.c.b16 %v381, %v365
    %v606 = vpack.c.b16 %v382, %v366
    %v607 = vpack.c.b16 %v383, %v367
    %v608 = vpack.c.b16 %v384, %v368
    %v609 = vpack.c.b16 %v385, %v369
    %v610 = vpack.c.b16 %v386, %v370
    %v611 = vpack.c.b16 %v387, %v371
    %v612 = vpack.c.b16 %v388, %v372
    %v613 = vpack.c.b16 %v389, %v373
    %v614 = vpack.c.b16 %v390, %v374
    %v615 = vpack.c.b16 %v391, %v375
    %v616 = vpack.c.b16 %v392, %v376
    %v617 = vpack.c.b16 %v393, %v377
    %v618 = vpack.c.b16 %v394, %v378
    %v619 = vpack.c.b16 %v395, %v379
    %v620 = vpack.c.b16 %v412, %v396
    %v621 = vpack.c.b16 %v413, %v397
    %v622 = vpack.c.b16 %v414, %v398
    %v623 = vpack.c.b16 %v415, %v399
    %v624 = vpack.c.b16 %v416, %v400
    %v625 = vpack.c.b16 %v417, %v401
    %v626 = vpack.c.b16 %v418, %v402
    %v627 = vpack.c.b16 %v419, %v403
    %v628 = vpack.c.b16 %v420, %v404
    %v629 = vpack.c.b16 %v421, %v405
    %v630 = vpack.c.b16 %v422, %v406
    %v631 = vpack.c.b16 %v423, %v407
    %v632 = vpack.c.b16 %v424, %v408
    %v633 = vpack.c.b16 %v425, %v409
    %v634 = vpack.c.b16 %v426, %v410
    %v635 = vpack.c.b16 %v427, %v411
    %v636 = vpack.c.b16 %v444, %v428
    %v637 = vpack.c.b16 %v445, %v429
    %v638 = vpack.c.b16 %v446, %v430
    %v639 = vpack.c.b16 %v447, %v431
    %v640 = vpack.c.b16 %v448, %v432
    %v641 = vpack.c.b16 %v449, %v433
    %v642 = vpack.c.b16 %v450, %v434
    %v643 = vpack.c.b16 %v451, %v435
    %v644 = vpack.c.b16 %v452, %v436
    %v645 = vpack.c.b16 %v453, %v437
    %v646 = vpack.c.b16 %v454, %v438
    %v647 = vpack.c.b16 %v455, %v439
    %v648 = vpack.c.b16 %v456, %v440
    %v649 = vpack.c.b16 %v457, %v441
    %v650 = vpack.c.b16 %v458, %v442
    %v651 = vpack.c.b16 %v459, %v443
    %v652 = vpack.c.b16 %v476, %v460
    %v653 = vpack.c.b16 %v477, %v461
    %v654 = vpack.c.b16 %v478, %v462
    %v655 = vpack.c.b16 %v479, %v463
    %v656 = vpack.c.b16 %v480, %v464
    %v657 = vpack.c.b16 %v481, %v465
    %v658 = vpack.c.b16 %v482, %v466
    %v659 = vpack.c.b16 %v483, %v467
    %v660 = vpack.c.b16 %v484, %v468
    %v661 = vpack.c.b16 %v485, %v469
    %v662 = vpack.c.b16 %v486, %v470
    %v663 = vpack.c.b16 %v487, %v471
    %v664 = vpack.c.b16 %v488, %v472
    %v665 = vpack.c.b16 %v489, %v473
    %v666 = vpack.c.b16 %v490, %v474
    %v667 = vpack.c.b16 %v491, %v475
    %v668 = vpack.c.b16 %v508, %v492
    %v669 = vpack.c.b16 %v509, %v493
    %v670 = vpack.c.b16 %v510, %v494
    %v671 = vpack.c.b16 %v511, %v495
    %v672 = vpack.c.b16 %v512, %v496
    %v673 = vpack.c.b16 %v513, %v497
    %v674 = vpack.c.b16 %v514, %v498
    %v675 = vpack.c.b16 %v515, %v499
    %v676 = vpack.c.b16 %v516, %v500
    %v677 = vpack.c.b16 %v517, %v501
    %v678 = vpack.c.b16 %v518, %v502
    %v679 = vpack.c.b16 %v519, %v503
    %v680 = vpack.c.b16 %v520, %v504
    %v681 = vpack.c.b16 %v521, %v505
    %v682 = vpack.c.b16 %v522, %v506
    %v683 = vpack.c.b16 %v523, %v507
    %v684 = vpack.c.b16 %v540, %v524
    %v685 = vpack.c.b16 %v541, %v525
    %v686 = vpack.c.b16 %v542, %v526
    %v687 = vpack.c.b16 %v543, %v527
    %v688 = vpack.c.b16 %v544, %v528
    %v689 = vpack.c.b16 %v545, %v529
    %v690 = vpack.c.b16 %v546, %v530
    %v691 = vpack.c.b16 %v547, %v531
    %v692 = vpack.c.b16 %v548, %v532
    %v693 = vpack.c.b16 %v549, %v533
    %v694 = vpack.c.b16 %v550, %v534
    %v695 = vpack.c.b16 %v551, %v535
    %v696 = vpack.c.b16 %v552, %v536
    %v697 = vpack.c.b16 %v553, %v537
    %v698 = vpack.c.b16 %v554, %v538
    %v699 = vpack.c.b16 %v555, %v539
    %v700 = vpack.c.b16 %v572, %v556
    %v701 = vpack.c.b16 %v573, %v557
    %v702 = vpack.c.b16 %v574, %v558
    %v703 = vpack.c.b16 %v575, %v559
    %v704 = vpack.c.b16 %v576, %v560
    %v705 = vpack.c.b16 %v577, %v561
    %v706 = vpack.c.b16 %v578, %v562
    %v707 = vpack.c.b16 %v579, %v563
    %v708 = vpack.c.b16 %v580, %v564
    %v709 = vpack.c.b16 %v581, %v565
    %v710 = vpack.c.b16 %v582, %v566
    %v711 = vpack.c.b16 %v583, %v567
    %v712 = vpack.c.b16 %v584, %v568
    %v713 = vpack.c.b16 %v585, %v569
    %v714 = vpack.c.b16 %v586, %v570
    %v715 = vpack.c.b16 %v587, %v571
    %844 = vmatpush.bf16.msra.mxu0 %v700
    %845 = vmatpush.bf16.msra.mxu0 %v684
    %846 = vmatpush.bf16.msra.mxu0 %v668
    %847 = vmatpush.bf16.msra.mxu0 %v652
    %848 = vmatpush.bf16.msra.mxu0 %v636
    %849 = vmatpush.bf16.msra.mxu0 %v620
    %850 = vmatpush.bf16.msra.mxu0 %v604
    %851 = vmatpush.bf16.msra.mxu0 %v588
    %852 = vmatmul.bf16.gmra.mxu0 %v202
    %v853 = vpop.f32.mrf.mxu0
    %v854 = vadd.f32 0.0, %v853
    %v855 = vpop.f32.mrf.mxu0
    %v856 = vadd.f32 0.0, %v855
    %857 = vdwg.mxu0
    %858 = vmatpush.bf16.msra.mxu0 %v701
    %859 = vmatpush.bf16.msra.mxu0 %v685
    %860 = vmatpush.bf16.msra.mxu0 %v669
    %861 = vmatpush.bf16.msra.mxu0 %v653
    %862 = vmatpush.bf16.msra.mxu0 %v637
    %863 = vmatpush.bf16.msra.mxu0 %v621
    %864 = vmatpush.bf16.msra.mxu0 %v605
    %865 = vmatpush.bf16.msra.mxu0 %v589
    %866 = vmatmul.bf16.gmra.mxu0 %v202
    %v867 = vpop.f32.mrf.mxu0
    %v868 = vadd.f32 0.0, %v867
    %v869 = vpop.f32.mrf.mxu0
    %v870 = vadd.f32 0.0, %v869
    %871 = vdwg.mxu0
    %872 = vmatpush.bf16.msra.mxu0 %v702
    %873 = vmatpush.bf16.msra.mxu0 %v686
    %874 = vmatpush.bf16.msra.mxu0 %v670
    %875 = vmatpush.bf16.msra.mxu0 %v654
    %876 = vmatpush.bf16.msra.mxu0 %v638
    %877 = vmatpush.bf16.msra.mxu0 %v622
    %878 = vmatpush.bf16.msra.mxu0 %v606
    %879 = vmatpush.bf16.msra.mxu0 %v590
    %880 = vmatmul.bf16.gmra.mxu0 %v202
    %v881 = vpop.f32.mrf.mxu0
    %v882 = vadd.f32 0.0, %v881
    %v883 = vpop.f32.mrf.mxu0
    %v884 = vadd.f32 0.0, %v883
    %885 = vdwg.mxu0
    %886 = vmatpush.bf16.msra.mxu0 %v703
    %887 = vmatpush.bf16.msra.mxu0 %v687
    %888 = vmatpush.bf16.msra.mxu0 %v671
    %889 = vmatpush.bf16.msra.mxu0 %v655
    %890 = vmatpush.bf16.msra.mxu0 %v639
    %891 = vmatpush.bf16.msra.mxu0 %v623
    %892 = vmatpush.bf16.msra.mxu0 %v607
    %893 = vmatpush.bf16.msra.mxu0 %v591
    %894 = vmatmul.bf16.gmra.mxu0 %v202
    %v895 = vpop.f32.mrf.mxu0
    %v896 = vadd.f32 0.0, %v895
    %v897 = vpop.f32.mrf.mxu0
    %v898 = vadd.f32 0.0, %v897
    %899 = vdwg.mxu0
    %900 = vmatpush.bf16.msra.mxu0 %v704
    %901 = vmatpush.bf16.msra.mxu0 %v688
    %902 = vmatpush.bf16.msra.mxu0 %v672
    %903 = vmatpush.bf16.msra.mxu0 %v656
    %904 = vmatpush.bf16.msra.mxu0 %v640
    %905 = vmatpush.bf16.msra.mxu0 %v624
    %906 = vmatpush.bf16.msra.mxu0 %v608
    %907 = vmatpush.bf16.msra.mxu0 %v592
    %908 = vmatmul.bf16.gmra.mxu0 %v202
    %v909 = vpop.f32.mrf.mxu0
    %v910 = vadd.f32 0.0, %v909
    %v911 = vpop.f32.mrf.mxu0
    %v912 = vadd.f32 0.0, %v911
    %913 = vdwg.mxu0
    %914 = vmatpush.bf16.msra.mxu0 %v705
    %915 = vmatpush.bf16.msra.mxu0 %v689
    %916 = vmatpush.bf16.msra.mxu0 %v673
    %917 = vmatpush.bf16.msra.mxu0 %v657
    %918 = vmatpush.bf16.msra.mxu0 %v641
    %919 = vmatpush.bf16.msra.mxu0 %v625
    %920 = vmatpush.bf16.msra.mxu0 %v609
    %921 = vmatpush.bf16.msra.mxu0 %v593
    %922 = vmatmul.bf16.gmra.mxu0 %v202
    %v923 = vpop.f32.mrf.mxu0
    %v924 = vadd.f32 0.0, %v923
    %v925 = vpop.f32.mrf.mxu0
    %v926 = vadd.f32 0.0, %v925
    %927 = vdwg.mxu0
    %928 = vmatpush.bf16.msra.mxu0 %v706
    %929 = vmatpush.bf16.msra.mxu0 %v690
    %930 = vmatpush.bf16.msra.mxu0 %v674
    %931 = vmatpush.bf16.msra.mxu0 %v658
    %932 = vmatpush.bf16.msra.mxu0 %v642
    %933 = vmatpush.bf16.msra.mxu0 %v626
    %934 = vmatpush.bf16.msra.mxu0 %v610
    %935 = vmatpush.bf16.msra.mxu0 %v594
    %936 = vmatmul.bf16.gmra.mxu0 %v202
    %v937 = vpop.f32.mrf.mxu0
    %v938 = vadd.f32 0.0, %v937
    %v939 = vpop.f32.mrf.mxu0
    %v940 = vadd.f32 0.0, %v939
    %941 = vdwg.mxu0
    %942 = vmatpush.bf16.msra.mxu0 %v707
    %943 = vmatpush.bf16.msra.mxu0 %v691
    %944 = vmatpush.bf16.msra.mxu0 %v675
    %945 = vmatpush.bf16.msra.mxu0 %v659
    %946 = vmatpush.bf16.msra.mxu0 %v643
    %947 = vmatpush.bf16.msra.mxu0 %v627
    %948 = vmatpush.bf16.msra.mxu0 %v611
    %949 = vmatpush.bf16.msra.mxu0 %v595
    %950 = vmatmul.bf16.gmra.mxu0 %v202
    %v951 = vpop.f32.mrf.mxu0
    %v952 = vadd.f32 0.0, %v951
    %v953 = vpop.f32.mrf.mxu0
    %v954 = vadd.f32 0.0, %v953
    %955 = vdwg.mxu0
    %956 = vmatpush.bf16.msra.mxu0 %v708
    %957 = vmatpush.bf16.msra.mxu0 %v692
    %958 = vmatpush.bf16.msra.mxu0 %v676
    %959 = vmatpush.bf16.msra.mxu0 %v660
    %960 = vmatpush.bf16.msra.mxu0 %v644
    %961 = vmatpush.bf16.msra.mxu0 %v628
    %962 = vmatpush.bf16.msra.mxu0 %v612
    %963 = vmatpush.bf16.msra.mxu0 %v596
    %964 = vmatmul.bf16.gmra.mxu0 %v202
    %v965 = vpop.f32.mrf.mxu0
    %v966 = vadd.f32 0.0, %v965
    %v967 = vpop.f32.mrf.mxu0
    %v968 = vadd.f32 0.0, %v967
    %969 = vdwg.mxu0
    %970 = vmatpush.bf16.msra.mxu0 %v709
    %971 = vmatpush.bf16.msra.mxu0 %v693
    %972 = vmatpush.bf16.msra.mxu0 %v677
    %973 = vmatpush.bf16.msra.mxu0 %v661
    %974 = vmatpush.bf16.msra.mxu0 %v645
    %975 = vmatpush.bf16.msra.mxu0 %v629
    %976 = vmatpush.bf16.msra.mxu0 %v613
    %977 = vmatpush.bf16.msra.mxu0 %v597
    %978 = vmatmul.bf16.gmra.mxu0 %v202
    %v979 = vpop.f32.mrf.mxu0
    %v980 = vadd.f32 0.0, %v979
    %v981 = vpop.f32.mrf.mxu0
    %v982 = vadd.f32 0.0, %v981
    %983 = vdwg.mxu0
    %984 = vmatpush.bf16.msra.mxu0 %v710
    %985 = vmatpush.bf16.msra.mxu0 %v694
    %986 = vmatpush.bf16.msra.mxu0 %v678
    %987 = vmatpush.bf16.msra.mxu0 %v662
    %988 = vmatpush.bf16.msra.mxu0 %v646
    %989 = vmatpush.bf16.msra.mxu0 %v630
    %990 = vmatpush.bf16.msra.mxu0 %v614
    %991 = vmatpush.bf16.msra.mxu0 %v598
    %992 = vmatmul.bf16.gmra.mxu0 %v202
    %v993 = vpop.f32.mrf.mxu0
    %v994 = vadd.f32 0.0, %v993
    %v995 = vpop.f32.mrf.mxu0
    %v996 = vadd.f32 0.0, %v995
    %997 = vdwg.mxu0
    %998 = vmatpush.bf16.msra.mxu0 %v711
    %999 = vmatpush.bf16.msra.mxu0 %v695
    %1000 = vmatpush.bf16.msra.mxu0 %v679
    %1001 = vmatpush.bf16.msra.mxu0 %v663
    %1002 = vmatpush.bf16.msra.mxu0 %v647
    %1003 = vmatpush.bf16.msra.mxu0 %v631
    %1004 = vmatpush.bf16.msra.mxu0 %v615
    %1005 = vmatpush.bf16.msra.mxu0 %v599
    %1006 = vmatmul.bf16.gmra.mxu0 %v202
    %v1007 = vpop.f32.mrf.mxu0
    %v1008 = vadd.f32 0.0, %v1007
    %v1009 = vpop.f32.mrf.mxu0
    %v1010 = vadd.f32 0.0, %v1009
    %1011 = vdwg.mxu0
    %1012 = vmatpush.bf16.msra.mxu0 %v712
    %1013 = vmatpush.bf16.msra.mxu0 %v696
    %1014 = vmatpush.bf16.msra.mxu0 %v680
    %1015 = vmatpush.bf16.msra.mxu0 %v664
    %1016 = vmatpush.bf16.msra.mxu0 %v648
    %1017 = vmatpush.bf16.msra.mxu0 %v632
    %1018 = vmatpush.bf16.msra.mxu0 %v616
    %1019 = vmatpush.bf16.msra.mxu0 %v600
    %1020 = vmatmul.bf16.gmra.mxu0 %v202
    %v1021 = vpop.f32.mrf.mxu0
    %v1022 = vadd.f32 0.0, %v1021
    %v1023 = vpop.f32.mrf.mxu0
    %v1024 = vadd.f32 0.0, %v1023
    %1025 = vdwg.mxu0
    %1026 = vmatpush.bf16.msra.mxu0 %v713
    %1027 = vmatpush.bf16.msra.mxu0 %v697
    %1028 = vmatpush.bf16.msra.mxu0 %v681
    %1029 = vmatpush.bf16.msra.mxu0 %v665
    %1030 = vmatpush.bf16.msra.mxu0 %v649
    %1031 = vmatpush.bf16.msra.mxu0 %v633
    %1032 = vmatpush.bf16.msra.mxu0 %v617
    %1033 = vmatpush.bf16.msra.mxu0 %v601
    %1034 = vmatmul.bf16.gmra.mxu0 %v202
    %v1035 = vpop.f32.mrf.mxu0
    %v1036 = vadd.f32 0.0, %v1035
    %v1037 = vpop.f32.mrf.mxu0
    %v1038 = vadd.f32 0.0, %v1037
    %1039 = vdwg.mxu0
    %1040 = vmatpush.bf16.msra.mxu0 %v714
    %1041 = vmatpush.bf16.msra.mxu0 %v698
    %1042 = vmatpush.bf16.msra.mxu0 %v682
    %1043 = vmatpush.bf16.msra.mxu0 %v666
    %1044 = vmatpush.bf16.msra.mxu0 %v650
    %1045 = vmatpush.bf16.msra.mxu0 %v634
    %1046 = vmatpush.bf16.msra.mxu0 %v618
    %1047 = vmatpush.bf16.msra.mxu0 %v602
    %1048 = vmatmul.bf16.gmra.mxu0 %v202
    %v1049 = vpop.f32.mrf.mxu0
    %v1050 = vadd.f32 0.0, %v1049
    %v1051 = vpop.f32.mrf.mxu0
    %v1052 = vadd.f32 0.0, %v1051
    %1053 = vdwg.mxu0
    %1054 = vmatpush.bf16.msra.mxu0 %v715
    %1055 = vmatpush.bf16.msra.mxu0 %v699
    %1056 = vmatpush.bf16.msra.mxu0 %v683
    %1057 = vmatpush.bf16.msra.mxu0 %v667
    %1058 = vmatpush.bf16.msra.mxu0 %v651
    %1059 = vmatpush.bf16.msra.mxu0 %v635
    %1060 = vmatpush.bf16.msra.mxu0 %v619
    %1061 = vmatpush.bf16.msra.mxu0 %v603
    %1062 = vmatmul.bf16.gmra.mxu0 %v202
    %v1063 = vpop.f32.mrf.mxu0
    %v1064 = vadd.f32 0.0, %v1063
    %v1065 = vpop.f32.mrf.mxu0
    %v1066 = vadd.f32 0.0, %v1065
    %1067 = vdwg.mxu0
    %v1068 = vstv %s67
    %v1069 = vmul.f32 %v1068, %v854
    %v1070 = vmul.f32 %v1068, %v868
    %v1071 = vmul.f32 %v1068, %v882
    %v1072 = vmul.f32 %v1068, %v896
    %v1073 = vmul.f32 %v1068, %v910
    %v1074 = vmul.f32 %v1068, %v924
    %v1075 = vmul.f32 %v1068, %v938
    %v1076 = vmul.f32 %v1068, %v952
    %v1077 = vmul.f32 %v1068, %v966
    %v1078 = vmul.f32 %v1068, %v980
    %v1079 = vmul.f32 %v1068, %v994
    %v1080 = vmul.f32 %v1068, %v1008
    %v1081 = vmul.f32 %v1068, %v1022
    %v1082 = vmul.f32 %v1068, %v1036
    %v1083 = vmul.f32 %v1068, %v1050
    %v1084 = vmul.f32 %v1068, %v1064
    %v1085 = vmul.f32 %v1068, %v856
    %v1086 = vmul.f32 %v1068, %v870
    %v1087 = vmul.f32 %v1068, %v884
    %v1088 = vmul.f32 %v1068, %v898
    %v1089 = vmul.f32 %v1068, %v912
    %v1090 = vmul.f32 %v1068, %v926
    %v1091 = vmul.f32 %v1068, %v940
    %v1092 = vmul.f32 %v1068, %v954
    %v1093 = vmul.f32 %v1068, %v968
    %v1094 = vmul.f32 %v1068, %v982
    %v1095 = vmul.f32 %v1068, %v996
    %v1096 = vmul.f32 %v1068, %v1010
    %v1097 = vmul.f32 %v1068, %v1024
    %v1098 = vmul.f32 %v1068, %v1038
    %v1099 = vmul.f32 %v1068, %v1052
    %v1100 = vmul.f32 %v1068, %v1066
    %1101 = vst [vmem:[#allocation10] sm:$0xff] %v1069
    %1102 = vst [vmem:[#allocation10 + $0x8] sm:$0xff] %v1070
    %1103 = vst [vmem:[#allocation10 + $0x10] sm:$0xff] %v1071
    %1104 = vst [vmem:[#allocation10 + $0x18] sm:$0xff] %v1072
    %1105 = vst [vmem:[#allocation10 + $0x20] sm:$0xff] %v1073
    %1106 = vst [vmem:[#allocation10 + $0x28] sm:$0xff] %v1074
    %1107 = vst [vmem:[#allocation10 + $0x30] sm:$0xff] %v1075
    %1108 = vst [vmem:[#allocation10 + $0x38] sm:$0xff] %v1076
    %1109 = vst [vmem:[#allocation10 + $0x40] sm:$0xff] %v1077
    %1110 = vst [vmem:[#allocation10 + $0x48] sm:$0xff] %v1078
    %1111 = vst [vmem:[#allocation10 + $0x50] sm:$0xff] %v1079
    %1112 = vst [vmem:[#allocation10 + $0x58] sm:$0xff] %v1080
    %1113 = vst [vmem:[#allocation10 + $0x60] sm:$0xff] %v1081
    %1114 = vst [vmem:[#allocation10 + $0x68] sm:$0xff] %v1082
    %1115 = vst [vmem:[#allocation10 + $0x70] sm:$0xff] %v1083
    %1116 = vst [vmem:[#allocation10 + $0x78] sm:$0xff] %v1084
    %1117 = vst [vmem:[#allocation10 + $0x80] sm:$0xff] %v1085
    %1118 = vst [vmem:[#allocation10 + $0x88] sm:$0xff] %v1086
    %1119 = vst [vmem:[#allocation10 + $0x90] sm:$0xff] %v1087
    %1120 = vst [vmem:[#allocation10 + $0x98] sm:$0xff] %v1088
    %1121 = vst [vmem:[#allocation10 + $0xa0] sm:$0xff] %v1089
    %1122 = vst [vmem:[#allocation10 + $0xa8] sm:$0xff] %v1090
    %1123 = vst [vmem:[#allocation10 + $0xb0] sm:$0xff] %v1091
    %1124 = vst [vmem:[#allocation10 + $0xb8] sm:$0xff] %v1092
    %1125 = vst [vmem:[#allocation10 + $0xc0] sm:$0xff] %v1093
    %1126 = vst [vmem:[#allocation10 + $0xc8] sm:$0xff] %v1094
    %1127 = vst [vmem:[#allocation10 + $0xd0] sm:$0xff] %v1095
    %1128 = vst [vmem:[#allocation10 + $0xd8] sm:$0xff] %v1096
    %1129 = vst [vmem:[#allocation10 + $0xe0] sm:$0xff] %v1097
    %1130 = vst [vmem:[#allocation10 + $0xe8] sm:$0xff] %v1098
    %1131 = vst [vmem:[#allocation10 + $0xf0] sm:$0xff] %v1099
    %1132 = vst [vmem:[#allocation10 + $0xf8] sm:$0xff] %v1100
    %v1133 = vld [vmem:[#allocation2] sm:$0xff]
    %v1134 = vld [vmem:[#allocation2 + $0x8] sm:$0xff]
    %v1135 = vmax.f32 %v1069, %v1071
    %v1136 = vmax.f32 %v1070, %v1072
    %v1137 = vmax.f32 %v1135, %v1073
    %v1138 = vmax.f32 %v1136, %v1074
    %v1139 = vmax.f32 %v1137, %v1075
    %v1140 = vmax.f32 %v1138, %v1076
    %v1141 = vmax.f32 %v1139, %v1077
    %v1142 = vmax.f32 %v1140, %v1078
    %v1143 = vmax.f32 %v1141, %v1079
    %v1144 = vmax.f32 %v1142, %v1080
    %v1145 = vmax.f32 %v1143, %v1081
    %v1146 = vmax.f32 %v1144, %v1082
    %v1147 = vmax.f32 %v1145, %v1083
    %v1148 = vmax.f32 %v1146, %v1084
    %v1149 = vmax.f32 %v1147, %v1148
    %1150 = vmax.xlane.f32.xlu0 %v1149
    %v1151 = vpop.xlane.xlu0 %1150
    %v1152 = vmax.f32 %v1085, %v1087
    %v1153 = vmax.f32 %v1086, %v1088
    %v1154 = vmax.f32 %v1152, %v1089
    %v1155 = vmax.f32 %v1153, %v1090
    %v1156 = vmax.f32 %v1154, %v1091
    %v1157 = vmax.f32 %v1155, %v1092
    %v1158 = vmax.f32 %v1156, %v1093
    %v1159 = vmax.f32 %v1157, %v1094
    %v1160 = vmax.f32 %v1158, %v1095
    %v1161 = vmax.f32 %v1159, %v1096
    %v1162 = vmax.f32 %v1160, %v1097
    %v1163 = vmax.f32 %v1161, %v1098
    %v1164 = vmax.f32 %v1162, %v1099
    %v1165 = vmax.f32 %v1163, %v1100
    %v1166 = vmax.f32 %v1164, %v1165
    %1167 = vmax.xlane.f32.xlu0 %v1166
    %v1168 = vpop.xlane.xlu0 %1167
    %v1169 = vmax.f32 %v1133, %v1151
    %v1170 = vmax.f32 %v1134, %v1168
    %v1171 = vld [vmem:[#allocation3] sm:$0xff]
    %v1172 = vld [vmem:[#allocation3 + $0x8] sm:$0xff]
    %v1173 = vsub.f32 %v1133, %v1169
    %v1174 = vsub.f32 %v1134, %v1170
    %v1175 = vmul.f32 %v1173, 1.442695
    %v1176 = vpow.pop %v1175
    %v1177 = vmul.f32 %v1174, 1.442695
    %v1178 = vpow.pop %v1177
    %v1179 = vmul.f32 %v1171, %v1176
    %v1180 = vmul.f32 %v1172, %v1178
    %1182 = vset.pattern.permute.xlu0 0
    %1183 = vperm.xlu0 %1182, %v1169
    %v1184 = vpop.permute.xlu0 %1183
    %1187 = vset.pattern.permute.xlu0 0
    %1188 = vperm.xlu0 %1187, %v1170
    %v1189 = vpop.permute.xlu0 %1188
    %v1191 = vsub.f32 %v1069, %v1184
    %v1192 = vsub.f32 %v1070, %v1184
    %v1193 = vsub.f32 %v1071, %v1184
    %v1194 = vsub.f32 %v1072, %v1184
    %v1195 = vsub.f32 %v1073, %v1184
    %v1196 = vsub.f32 %v1074, %v1184
    %v1197 = vsub.f32 %v1075, %v1184
    %v1198 = vsub.f32 %v1076, %v1184
    %v1199 = vsub.f32 %v1077, %v1184
    %v1200 = vsub.f32 %v1078, %v1184
    %v1201 = vsub.f32 %v1079, %v1184
    %v1202 = vsub.f32 %v1080, %v1184
    %v1203 = vsub.f32 %v1081, %v1184
    %v1204 = vsub.f32 %v1082, %v1184
    %v1205 = vsub.f32 %v1083, %v1184
    %v1206 = vsub.f32 %v1084, %v1184
    %v1207 = vsub.f32 %v1085, %v1189
    %v1208 = vsub.f32 %v1086, %v1189
    %v1209 = vsub.f32 %v1087, %v1189
    %v1210 = vsub.f32 %v1088, %v1189
    %v1211 = vsub.f32 %v1089, %v1189
    %v1212 = vsub.f32 %v1090, %v1189
    %v1213 = vsub.f32 %v1091, %v1189
    %v1214 = vsub.f32 %v1092, %v1189
    %v1215 = vsub.f32 %v1093, %v1189
    %v1216 = vsub.f32 %v1094, %v1189
    %v1217 = vsub.f32 %v1095, %v1189
    %v1218 = vsub.f32 %v1096, %v1189
    %v1219 = vsub.f32 %v1097, %v1189
    %v1220 = vsub.f32 %v1098, %v1189
    %v1221 = vsub.f32 %v1099, %v1189
    %v1222 = vsub.f32 %v1100, %v1189
    %v1223 = vmul.f32 %v1191, 1.442695
    %v1224 = vpow.pop %v1223
    %v1225 = vmul.f32 %v1192, 1.442695
    %v1226 = vpow.pop %v1225
    %v1227 = vmul.f32 %v1193, 1.442695
    %v1228 = vpow.pop %v1227
    %v1229 = vmul.f32 %v1194, 1.442695
    %v1230 = vpow.pop %v1229
    %v1231 = vmul.f32 %v1195, 1.442695
    %v1232 = vpow.pop %v1231
    %v1233 = vmul.f32 %v1196, 1.442695
    %v1234 = vpow.pop %v1233
    %v1235 = vmul.f32 %v1197, 1.442695
    %v1236 = vpow.pop %v1235
    %v1237 = vmul.f32 %v1198, 1.442695
    %v1238 = vpow.pop %v1237
    %v1239 = vmul.f32 %v1199, 1.442695
    %v1240 = vpow.pop %v1239
    %v1241 = vmul.f32 %v1200, 1.442695
    %v1242 = vpow.pop %v1241
    %v1243 = vmul.f32 %v1201, 1.442695
    %v1244 = vpow.pop %v1243
    %v1245 = vmul.f32 %v1202, 1.442695
    %v1246 = vpow.pop %v1245
    %v1247 = vmul.f32 %v1203, 1.442695
    %v1248 = vpow.pop %v1247
    %v1249 = vmul.f32 %v1204, 1.442695
    %v1250 = vpow.pop %v1249
    %v1251 = vmul.f32 %v1205, 1.442695
    %v1252 = vpow.pop %v1251
    %v1253 = vmul.f32 %v1206, 1.442695
    %v1254 = vpow.pop %v1253
    %v1255 = vmul.f32 %v1207, 1.442695
    %v1256 = vpow.pop %v1255
    %v1257 = vmul.f32 %v1208, 1.442695
    %v1258 = vpow.pop %v1257
    %v1259 = vmul.f32 %v1209, 1.442695
    %v1260 = vpow.pop %v1259
    %v1261 = vmul.f32 %v1210, 1.442695
    %v1262 = vpow.pop %v1261
    %v1263 = vmul.f32 %v1211, 1.442695
    %v1264 = vpow.pop %v1263
    %v1265 = vmul.f32 %v1212, 1.442695
    %v1266 = vpow.pop %v1265
    %v1267 = vmul.f32 %v1213, 1.442695
    %v1268 = vpow.pop %v1267
    %v1269 = vmul.f32 %v1214, 1.442695
    %v1270 = vpow.pop %v1269
    %v1271 = vmul.f32 %v1215, 1.442695
    %v1272 = vpow.pop %v1271
    %v1273 = vmul.f32 %v1216, 1.442695
    %v1274 = vpow.pop %v1273
    %v1275 = vmul.f32 %v1217, 1.442695
    %v1276 = vpow.pop %v1275
    %v1277 = vmul.f32 %v1218, 1.442695
    %v1278 = vpow.pop %v1277
    %v1279 = vmul.f32 %v1219, 1.442695
    %v1280 = vpow.pop %v1279
    %v1281 = vmul.f32 %v1220, 1.442695
    %v1282 = vpow.pop %v1281
    %v1283 = vmul.f32 %v1221, 1.442695
    %v1284 = vpow.pop %v1283
    %v1285 = vmul.f32 %v1222, 1.442695
    %v1286 = vpow.pop %v1285
    %v1287 = vadd.f32 %v1224, %v1226
    %v1288 = vadd.f32 %v1287, %v1228
    %v1289 = vadd.f32 %v1288, %v1230
    %v1290 = vadd.f32 %v1289, %v1232
    %v1291 = vadd.f32 %v1290, %v1234
    %v1292 = vadd.f32 %v1291, %v1236
    %v1293 = vadd.f32 %v1292, %v1238
    %v1294 = vadd.f32 %v1293, %v1240
    %v1295 = vadd.f32 %v1294, %v1242
    %v1296 = vadd.f32 %v1295, %v1244
    %v1297 = vadd.f32 %v1296, %v1246
    %v1298 = vadd.f32 %v1297, %v1248
    %v1299 = vadd.f32 %v1298, %v1250
    %v1300 = vadd.f32 %v1299, %v1252
    %v1301 = vadd.f32 %v1300, %v1254
    %1302 = vadd.xlane.f32.xlu0 %v1301
    %v1303 = vpop.xlane.xlu0 %1302
    %v1304 = vadd.f32 %v1256, %v1258
    %v1305 = vadd.f32 %v1304, %v1260
    %v1306 = vadd.f32 %v1305, %v1262
    %v1307 = vadd.f32 %v1306, %v1264
    %v1308 = vadd.f32 %v1307, %v1266
    %v1309 = vadd.f32 %v1308, %v1268
    %v1310 = vadd.f32 %v1309, %v1270
    %v1311 = vadd.f32 %v1310, %v1272
    %v1312 = vadd.f32 %v1311, %v1274
    %v1313 = vadd.f32 %v1312, %v1276
    %v1314 = vadd.f32 %v1313, %v1278
    %v1315 = vadd.f32 %v1314, %v1280
    %v1316 = vadd.f32 %v1315, %v1282
    %v1317 = vadd.f32 %v1316, %v1284
    %v1318 = vadd.f32 %v1317, %v1286
    %1319 = vadd.xlane.f32.xlu0 %v1318
    %v1320 = vpop.xlane.xlu0 %1319
    %v1321 = vadd.f32 %v1179, %v1303
    %v1322 = vadd.f32 %v1180, %v1320
    %vm1323 = vcmask 7168
    %1324 = vst.msk [vmem:[#allocation3] sm:$0xff] %vm1323, %v1321
    %1325 = vst.msk [vmem:[#allocation3 + $0x8] sm:$0xff] %vm1323, %v1322
    %1326 = vst.msk [vmem:[#allocation2] sm:$0xff] %vm1323, %v1169
    %1327 = vst.msk [vmem:[#allocation2 + $0x8] sm:$0xff] %vm1323, %v1170
    // Predicated region
    $region26: #{tpu_custom_call.1} parent=1 // pred_check
      %p1328 = pneg %p58
    $region27: #{tpu_custom_call.1} parent=1 // pred_check_branch
      %1330 = sbr.rel (%p1328) target = $region29
    $region28: #{tpu_custom_call.1} parent=1 // pred_region
      %v1331 = vld [vmem:[#allocation2] sm:$0xff]
      %v1332 = vld [vmem:[#allocation2 + $0x8] sm:$0xff]
      %v1333 = vld [vmem:[#allocation3] sm:$0xff]
      %v1334 = vld [vmem:[#allocation3 + $0x8] sm:$0xff]
      %v1335 = vlog2.pop %v1333
      %v1336 = vmul.f32 %v1335, 0.6931472
      %v1337 = vlog2.pop %v1334
      %v1338 = vmul.f32 %v1337, 0.6931472
      %v1339 = vadd.f32 %v1331, %v1336
      %v1340 = vadd.f32 %v1332, %v1338
      %1341 = vst.msk [vmem:[%s4] sm:$0xff] %vm1323, %v1339
      %1342 = vst.msk [vmem:[%s4 + $0x8] sm:$0xff] %vm1323, %v1340
    $region29: #{tpu_custom_call.1} parent=1 // pred_fallthru
      _
    // Predicated region
    $region30: #{tpu_custom_call.1} parent=1 // pred_check
      _
    $region31: #{tpu_custom_call.1} parent=1 // pred_check_branch
      %1344 = sbr.rel (0) target = $region33
    $region32: #{tpu_custom_call.1} parent=1 // pred_region
      %s1345 = sadd.s32 0, 0
      %s1346 = smul.u32 16, %s1345
      %1348 = vsyncadd [#allocation7], 0
      %s1349 = smul.addr %s1346, 8
      %s1350 = scalar_lea.hbm %s3, %s1349
      %s1351 = sshll.u32 [#allocation10], 4
      %s1352 = int_to_ptr.vmem [resolvable:$true] %s1351
      %s1353 = sshll.u32 %s1350, 4
      %s1354 = int_to_ptr.hbm [resolvable:$true] %s1353
      %1359 = dma.vmem_to_hbm [thread:$0]  %s1352, 4096, %s1354, [#allocation7], 2048, 2048, 128
    $region33: #{tpu_custom_call.1} parent=1 // pred_fallthru
      _
    // Predicated region
    $region34: #{tpu_custom_call.1} parent=1 // pred_check
      _
    $region35: #{tpu_custom_call.1} parent=1 // pred_check_branch
      %1361 = sbr.rel (0) target = $region37
    $region36: #{tpu_custom_call.1} parent=1 // pred_region
      _
    $region37: #{tpu_custom_call.1} parent=1 // pred_fallthru
      _
    // Predicated region
    $region38: #{tpu_custom_call.1} parent=1 // pred_check
      _
    $region39: #{tpu_custom_call.1} parent=1 // pred_check_branch
      %1363 = sbr.rel (0) target = $region41
    $region40: #{tpu_custom_call.1} parent=1 // pred_region
      %1365 = dma.done [#allocation7], 4096
    $region41: #{tpu_custom_call.1} parent=1 // pred_fallthru
      _
    // Predicated region
    $region42: #{tpu_custom_call.1} parent=1 // pred_check
      _
    $region43: #{tpu_custom_call.1} parent=1 // pred_check_branch
      %1367 = sbr.rel (0) target = $region45
    $region44: #{tpu_custom_call.1} parent=1 // pred_region
      _
    $region45: #{tpu_custom_call.1} parent=1 // pred_fallthru
      _
    %1368 = vsyncpa [#allocation6], 1
    %1369 = vsyncpa [#allocation9], 1
    %1370 = vsyncpa [#allocation7], 1

</llo_original>
